<compile_context>
chip_gen: v7x
topology: tpu7x:2x2x1
jax: 0.10.0
libtpu: 0.0.40
codegen_flags: <defaults>
</compile_context>

<pallas_src>
import jax
import jax.numpy as jnp
from jax.experimental import pallas as pl
from jax.experimental.pallas import tpu as pltpu


def cbam_kernel(x_ref, w1t_ref, w2t_ref, mmax_ref, mmean_ref, o_ref):
    """One batch tile (bt images) per grid step.

    x_ref    : (bt, C, HW) VMEM  input tile (lane-dense last dim)
    w1t_ref  : (C, Cr)     VMEM  first 1x1 conv weight, transposed, pre-scaled by 1/HW
    w2t_ref  : (Cr, C)     VMEM  second 1x1 conv weight, transposed
    mmax_ref : (HW, HW)    VMEM  dense SAME-conv operator for the channel-max plane
    mmean_ref: (HW, HW)    VMEM  dense SAME-conv operator for the channel-mean plane
                                 (1/C folded in, so it consumes the channel SUM)
    o_ref    : (bt, C, HW) VMEM
    """
    x = x_ref[...]                                            # (bt, C, HW)

    # ---- channel attention: GAP (as a sum; 1/HW folded into w1t) -> MLP -> sigmoid
    pooled = jnp.sum(x, axis=2, dtype=jnp.float32)            # (bt, C)
    h1 = jnp.maximum(
        jnp.dot(pooled, w1t_ref[...], preferred_element_type=jnp.float32), 0.0)
    att = jax.nn.sigmoid(
        jnp.dot(h1, w2t_ref[...], preferred_element_type=jnp.float32))  # (bt, C)
    ca = x * att.astype(x.dtype)[:, :, None]                  # (bt, C, HW)

    # ---- spatial attention inputs: channel max and channel SUM (1/C is in M_mean)
    mx = jnp.max(ca, axis=1).astype(jnp.float32)              # (bt, HW)
    sm = jnp.sum(ca, axis=1, dtype=jnp.float32)               # (bt, HW)

    # ---- KxK SAME conv as two small dense matmuls on the MXU
    logit = (jnp.dot(mx, mmax_ref[...], preferred_element_type=jnp.float32)
             + jnp.dot(sm, mmean_ref[...], preferred_element_type=jnp.float32))
    sa = jax.nn.sigmoid(logit)                                 # (bt, HW)

    o_ref[...] = (ca * sa.astype(ca.dtype)[:, None, :]).astype(o_ref.dtype)


def _build_spatial_conv_operator(wk, H, W, C):
    """Dense operators M_max, M_mean of shape (HW, HW), rows=input, cols=output.

    M[i, j] = weight[(h_i - h_j) + p, (w_i - w_j) + p] if both offsets are
    within [-p, p], else 0 -- i.e. the SAME-padded KxK cross-correlation with
    the zero padding baked in. The channel-mean's 1/C is folded into M_mean so
    the kernel can feed it the channel SUM.
    """
    wk = jnp.asarray(wk, jnp.float32)
    K = wk.shape[-1]
    p = K // 2
    HW = H * W
    idx = jnp.arange(HW)
    h = idx // W
    w = idx % W
    dh = h[:, None] - h[None, :]                  # h_in - h_out
    dw = w[:, None] - w[None, :]                  # w_in - w_out
    valid = (jnp.abs(dh) <= p) & (jnp.abs(dw) <= p)
    tap_h = jnp.clip(dh + p, 0, K - 1)
    tap_w = jnp.clip(dw + p, 0, K - 1)
    m_max = jnp.where(valid, wk[0][tap_h, tap_w], 0.0)
    m_mean = jnp.where(valid, wk[1][tap_h, tap_w], 0.0) / C
    return m_max, m_mean


def _pick_block_b(B, per_image_bytes, target_bytes=6 << 20):
    """Largest batch tile whose block stays under `target_bytes`.

    Bigger tiles amortize the ~0.35us per-grid-step overhead (matters on the
    single-TC 128 MiB-VMEM v5e/v6e), while the ~6 MiB cap keeps the double-
    buffered in/out blocks plus in-kernel f32 temps well under v7x's 64 MiB
    VMEM. When it costs at most a 2x smaller block, prefer an even number of
    grid steps so both v7x TensorCores get equal work under "parallel".
    """
    fits = [bt for bt in range(1, B + 1)
            if B % bt == 0 and bt * per_image_bytes <= target_bytes]
    if not fits:
        return 1
    best = max(fits)
    steps = B // best
    if steps > 1 and steps % 2 == 1:
        even = [bt for bt in fits if (B // bt) % 2 == 0 and 2 * bt >= best]
        if even:
            return max(even)
    return best


def cbam_pallas(x, w1, w2, wk, kernel_size=7, block_b=None):
    """x: (B, C, H, W); w1: (Cr, C); w2: (C, Cr); wk: (2, K, K)."""
    B, C, H, W = x.shape
    Cr = w1.shape[0]
    K = kernel_size
    assert K % 2 == 1, "zero pad of K//2 only matches SAME padding for odd K"
    HW = H * W

    x2 = x.reshape(B, C, HW)                               # lane-dense last dim
    # Fold the 1/HW of the global average pool into the first MLP weight.
    w1t = jnp.asarray(w1, jnp.float32).T / HW              # (C, Cr)
    w2t = jnp.asarray(w2, jnp.float32).T                   # (Cr, C)
    m_max, m_mean = _build_spatial_conv_operator(wk, H, W, C)  # (HW, HW) each

    per_image = C * HW * x.dtype.itemsize
    bt = _pick_block_b(B, per_image) if block_b is None else block_b
    assert B % bt == 0

    block_bytes = bt * per_image
    # 2x double-buffered input + 2x output + f32 temps + operator matrices,
    # capped at 48 MiB to leave headroom below v7x's 64 MiB physical VMEM
    # (also covers v5e's 16 MiB scoped default).
    vmem_limit = int(min(max(32 << 20, 6 * block_bytes + (4 << 20)), 48 << 20))

    out = pl.pallas_call(
        cbam_kernel,
        out_shape=jax.ShapeDtypeStruct((B, C, HW), x.dtype),
        grid_spec=pltpu.PrefetchScalarGridSpec(
            num_scalar_prefetch=0,
            grid=(B // bt,),
            in_specs=[
                pl.BlockSpec((bt, C, HW), lambda b: (b, 0, 0)),
                pl.BlockSpec((C, Cr), lambda b: (0, 0)),
                pl.BlockSpec((Cr, C), lambda b: (0, 0)),
                pl.BlockSpec((HW, HW), lambda b: (0, 0)),
                pl.BlockSpec((HW, HW), lambda b: (0, 0)),
            ],
            out_specs=pl.BlockSpec((bt, C, HW), lambda b: (b, 0, 0)),
        ),
        compiler_params=pltpu.CompilerParams(
            dimension_semantics=("parallel",),
            vmem_limit_bytes=vmem_limit),
    )(x2, w1t, w2t, m_max, m_mean)
    return out.reshape(B, C, H, W)


def cbam_reference(x, w1, w2, wk):
    """Pure-JAX reference matching the PyTorch module semantics (NCHW)."""
    pooled = jnp.mean(x, axis=(2, 3))                      # (B, C)
    h1 = jax.nn.relu(pooled @ w1.T)                        # (B, Cr)
    att = jax.nn.sigmoid(h1 @ w2.T)                        # (B, C)
    ca = x * att[:, :, None, None]

    mx = jnp.max(ca, axis=1, keepdims=True)
    av = jnp.mean(ca, axis=1, keepdims=True)
    sa_in = jnp.concatenate([mx, av], axis=1)              # (B, 2, H, W)
    logit = jax.lax.conv_general_dilated(
        sa_in, wk[None],                                   # (1, 2, K, K) OIHW
        window_strides=(1, 1), padding="SAME",
        dimension_numbers=("NCHW", "OIHW", "NCHW"))
    sa = jax.nn.sigmoid(logit)                             # (B, 1, H, W)
    return ca * sa


if __name__ == "__main__":
    B, C, H, W = 2, 32, 16, 16
    reduction, K = 16, 7
    Cr = C // reduction

    key = jax.random.PRNGKey(0)
    kx, k1, k2, kk = jax.random.split(key, 4)
    x = jax.random.normal(kx, (B, C, H, W), dtype=jnp.float32)
    # nn.Conv2d(C, C//r, 1, bias=False).weight  -> (Cr, C, 1, 1) -> (Cr, C)
    w1 = 0.1 * jax.random.normal(k1, (Cr, C), dtype=jnp.float32)
    # nn.Conv2d(C//r, C, 1, bias=False).weight  -> (C, Cr, 1, 1) -> (C, Cr)
    w2 = 0.1 * jax.random.normal(k2, (C, Cr), dtype=jnp.float32)
    # nn.Conv2d(2, 1, 7, padding=3, bias=False).weight -> (1, 2, 7, 7) -> (2, 7, 7)
    wk = 0.1 * jax.random.normal(kk, (2, K, K), dtype=jnp.float32)

    out = jax.block_until_ready(cbam_pallas(x, w1, w2, wk, kernel_size=K))
    ref = jax.block_until_ready(cbam_reference(x, w1, w2, wk))

    assert out.shape == (B, C, H, W)
    err = float(jnp.max(jnp.abs(out - ref)))
    assert jnp.allclose(out, ref, atol=1e-3, rtol=1e-3), f"max abs err = {err}"

    print("KERNEL_OK")
</pallas_src>

<mosaic_0001>
module attributes {stable_mosaic.version = 11 : i64} {
  func.func @cbam_kernel(%arg0: i32, %arg1: memref<2x32x256xf32, #tpu.memory_space<vmem>>, %arg2: memref<32x2xf32, #tpu.memory_space<vmem>>, %arg3: memref<2x32xf32, #tpu.memory_space<vmem>>, %arg4: memref<256x256xf32, #tpu.memory_space<vmem>>, %arg5: memref<256x256xf32, #tpu.memory_space<vmem>>, %arg6: memref<2x32x256xf32, #tpu.memory_space<vmem>>) attributes {dimension_semantics = [#tpu.dimension_semantics<parallel>], iteration_bounds = array<i64: 1>, scalar_prefetch = 0 : i64, scratch_operands = 0 : i64, tpu.core_type = #tpu.core_type<tc>, window_params = [{transform_indices = @transform_0, window_bounds = array<i64: 2, 32, 256>}, {pipeline_mode = #tpu.pipeline_mode<synchronous>, transform_indices = @transform_1, window_bounds = array<i64: 32, 2>}, {pipeline_mode = #tpu.pipeline_mode<synchronous>, transform_indices = @transform_2, window_bounds = array<i64: 2, 32>}, {pipeline_mode = #tpu.pipeline_mode<synchronous>, transform_indices = @transform_3, window_bounds = array<i64: 256, 256>}, {pipeline_mode = #tpu.pipeline_mode<synchronous>, transform_indices = @transform_4, window_bounds = array<i64: 256, 256>}, {transform_indices = @transform_5, window_bounds = array<i64: 2, 32, 256>}]} {
    %c0 = arith.constant 0 : index
    %c0_0 = arith.constant 0 : index
    %c0_1 = arith.constant 0 : index
    %0 = vector.load %arg1[%c0, %c0_0, %c0_1] : memref<2x32x256xf32, #tpu.memory_space<vmem>>, vector<2x32x256xf32>
    %cst = arith.constant dense<0.000000e+00> : vector<2x32xf32>
    %1 = vector.multi_reduction <add>, %0, %cst [2] : vector<2x32x256xf32> to vector<2x32xf32>
    %c0_2 = arith.constant 0 : index
    %c0_3 = arith.constant 0 : index
    %2 = vector.load %arg2[%c0_2, %c0_3] : memref<32x2xf32, #tpu.memory_space<vmem>>, vector<32x2xf32>
    %cst_4 = arith.constant dense<0.000000e+00> : vector<2x2xf32>
    %3 = tpu.matmul %1, %2, %cst_4 {dimension_numbers = #tpu.dot_dimension_numbers<[1], [0], [0], [1], [0, 0, 1, 1], [], []>} : vector<2x32xf32>, vector<32x2xf32>, vector<2x2xf32> -> vector<2x2xf32>
    %cst_5 = arith.constant 0.000000e+00 : f32
    %4 = vector.broadcast %cst_5 : f32 to vector<2x2xf32>
    %5 = arith.maximumf %3, %4 : vector<2x2xf32>
    %c0_6 = arith.constant 0 : index
    %c0_7 = arith.constant 0 : index
    %6 = vector.load %arg3[%c0_6, %c0_7] : memref<2x32xf32, #tpu.memory_space<vmem>>, vector<2x32xf32>
    %cst_8 = arith.constant dense<0.000000e+00> : vector<2x32xf32>
    %7 = tpu.matmul %5, %6, %cst_8 {dimension_numbers = #tpu.dot_dimension_numbers<[1], [0], [0], [1], [0, 0, 1, 1], [], []>} : vector<2x2xf32>, vector<2x32xf32>, vector<2x32xf32> -> vector<2x32xf32>
    %8 = arith.negf %7 : vector<2x32xf32>
    %9 = math.exp %8 : vector<2x32xf32>
    %cst_9 = arith.constant 1.000000e+00 : f32
    %10 = vector.broadcast %cst_9 : f32 to vector<2x32xf32>
    %11 = arith.addf %10, %9 : vector<2x32xf32>
    %12 = arith.divf %10, %11 : vector<2x32xf32>
    %13 = vector.shape_cast %12 : vector<2x32xf32> to vector<2x32x1xf32>
    %14 = vector.broadcast %13 : vector<2x32x1xf32> to vector<2x32x256xf32>
    %15 = arith.mulf %0, %14 : vector<2x32x256xf32>
    %cst_10 = arith.constant dense<0xFF800000> : vector<2x256xf32>
    %16 = vector.multi_reduction <maximumf>, %15, %cst_10 [1] : vector<2x32x256xf32> to vector<2x256xf32>
    %cst_11 = arith.constant dense<0.000000e+00> : vector<2x256xf32>
    %17 = vector.multi_reduction <add>, %15, %cst_11 [1] : vector<2x32x256xf32> to vector<2x256xf32>
    %c0_12 = arith.constant 0 : index
    %c0_13 = arith.constant 0 : index
    %18 = vector.load %arg4[%c0_12, %c0_13] : memref<256x256xf32, #tpu.memory_space<vmem>>, vector<256x256xf32>
    %cst_14 = arith.constant dense<0.000000e+00> : vector<2x256xf32>
    %19 = tpu.matmul %16, %18, %cst_14 {dimension_numbers = #tpu.dot_dimension_numbers<[1], [0], [0], [1], [0, 0, 1, 1], [], []>} : vector<2x256xf32>, vector<256x256xf32>, vector<2x256xf32> -> vector<2x256xf32>
    %c0_15 = arith.constant 0 : index
    %c0_16 = arith.constant 0 : index
    %20 = vector.load %arg5[%c0_15, %c0_16] : memref<256x256xf32, #tpu.memory_space<vmem>>, vector<256x256xf32>
    %cst_17 = arith.constant dense<0.000000e+00> : vector<2x256xf32>
    %21 = tpu.matmul %17, %20, %cst_17 {dimension_numbers = #tpu.dot_dimension_numbers<[1], [0], [0], [1], [0, 0, 1, 1], [], []>} : vector<2x256xf32>, vector<256x256xf32>, vector<2x256xf32> -> vector<2x256xf32>
    %22 = arith.addf %19, %21 : vector<2x256xf32>
    %23 = arith.negf %22 : vector<2x256xf32>
    %24 = math.exp %23 : vector<2x256xf32>
    %cst_18 = arith.constant 1.000000e+00 : f32
    %25 = vector.broadcast %cst_18 : f32 to vector<2x256xf32>
    %26 = arith.addf %25, %24 : vector<2x256xf32>
    %27 = arith.divf %25, %26 : vector<2x256xf32>
    %28 = vector.shape_cast %27 : vector<2x256xf32> to vector<2x1x256xf32>
    %29 = vector.broadcast %28 : vector<2x1x256xf32> to vector<2x32x256xf32>
    %30 = arith.mulf %15, %29 : vector<2x32x256xf32>
    %c0_19 = arith.constant 0 : index
    %c0_20 = arith.constant 0 : index
    %c0_21 = arith.constant 0 : index
    %31 = vector.load %arg6[%c0_19, %c0_20, %c0_21] : memref<2x32x256xf32, #tpu.memory_space<vmem>>, vector<2x32x256xf32>
    tpu.vector_store %arg6[%c0_19, %c0_20, %c0_21], %30 {strides = array<i32>} : memref<2x32x256xf32, #tpu.memory_space<vmem>>, vector<2x32x256xf32>,
    return
  }
  func.func @transform_0(%arg0: i32) -> (i32, i32, i32) {
    %c0_i32 = arith.constant 0 : i32
    %c0_i32_0 = arith.constant 0 : i32
    %c0_i32_1 = arith.constant 0 : i32
    return %arg0, %c0_i32, %c0_i32_0 : i32, i32, i32
  }
  func.func @transform_1(%arg0: i32) -> (i32, i32) {
    %c0_i32 = arith.constant 0 : i32
    %c0_i32_0 = arith.constant 0 : i32
    %c0_i32_1 = arith.constant 0 : i32
    return %c0_i32, %c0_i32_0 : i32, i32
  }
  func.func @transform_2(%arg0: i32) -> (i32, i32) {
    %c0_i32 = arith.constant 0 : i32
    %c0_i32_0 = arith.constant 0 : i32
    %c0_i32_1 = arith.constant 0 : i32
    return %c0_i32, %c0_i32_0 : i32, i32
  }
  func.func @transform_3(%arg0: i32) -> (i32, i32) {
    %c0_i32 = arith.constant 0 : i32
    %c0_i32_0 = arith.constant 0 : i32
    %c0_i32_1 = arith.constant 0 : i32
    return %c0_i32, %c0_i32_0 : i32, i32
  }
  func.func @transform_4(%arg0: i32) -> (i32, i32) {
    %c0_i32 = arith.constant 0 : i32
    %c0_i32_0 = arith.constant 0 : i32
    %c0_i32_1 = arith.constant 0 : i32
    return %c0_i32, %c0_i32_0 : i32, i32
  }
  func.func @transform_5(%arg0: i32) -> (i32, i32, i32) {
    %c0_i32 = arith.constant 0 : i32
    %c0_i32_0 = arith.constant 0 : i32
    %c0_i32_1 = arith.constant 0 : i32
    return %arg0, %c0_i32, %c0_i32_0 : i32, i32, i32
  }
}

</mosaic_0001>

<llo_original>
// kernel: tpu_custom_call.1
$region0: #{tpu_custom_call.1}
  #allocation0 [shape = 'u32[]', space=smem, size = 0x4, offset = 0x4, fixed_abs, tag = 'smem constant byte address 0x4 - core index']
  #allocation1 [shape = 'u32[144,128]{1,0:T(1,128)}', space=vmem, size = 0x12000, scoped, tag = 'internal scratch']
  %s0 = inlined_call_operand.hbm [shape: f32[2,32,256], index: 0, kind: input, shape index: {}]
  %s1 = inlined_call_operand.vmem [shape: f32[32,2], index: 1, kind: input, shape index: {}]
  %s2 = inlined_call_operand.vmem [shape: f32[2,32], index: 2, kind: input, shape index: {}]
  %s3 = inlined_call_operand.hbm [shape: f32[256,256], index: 3, kind: input, shape index: {}]
  %s4 = inlined_call_operand.hbm [shape: f32[256,256], index: 4, kind: input, shape index: {}]
  %s5 = inlined_call_operand.hbm [shape: f32[2,32,256], index: 5, kind: output, shape index: {}]
  %s6 = sld [smem:[#allocation0]]
  $region42: #{tpu_custom_call.1} parent=0
    _
  %s8 = ssub.s32 1, %s6
  %s9 = scalar_select 0, %s8, %s6
  $region1: #{tpu_custom_call.1} parent=0
    #allocation2 [shape = 'u8[65536]{0}', space=vmem, size = 0x10000, scoped, tag = 'input window, operand 0, single buffered']
    #allocation3 [shape = 's32[1]{0}', space=sflag, size = 0x4, scoped, tag = 'scoped memory for tpu_custom_call.1']
    #allocation4 [shape = 's32[1]{0}', space=sflag, size = 0x4, scoped, tag = 'scoped memory for tpu_custom_call.1']
    #allocation5 [shape = 'u8[262144]{0}', space=vmem, size = 0x40000, scoped, tag = 'input window, operand 3, single buffered']
    #allocation6 [shape = 's32[1]{0}', space=sflag, size = 0x4, scoped, tag = 'scoped memory for tpu_custom_call.1']
    #allocation7 [shape = 'u8[262144]{0}', space=vmem, size = 0x40000, scoped, tag = 'input window, operand 4, single buffered']
    #allocation8 [shape = 'u8[65536]{0}', space=vmem, size = 0x10000, scoped, tag = 'output window, operand 0, single buffered']
    %10 = vsyncpa [#allocation3], 0
    %11 = vsyncpa [#allocation6], 0
    %12 = vsyncpa [#allocation4], 0
    // Predicated region
    $region2: #{tpu_custom_call.1} parent=1 // pred_check
      _
    $region3: #{tpu_custom_call.1} parent=1 // pred_check_branch
      %14 = sbr.rel (0) target = $region5
    $region4: #{tpu_custom_call.1} parent=1 // pred_region
      %s16 = ssub.s32 2048, 2048
      %17 = vsyncadd [#allocation3], %s16
      %s18 = sshll.u32 [#allocation2], 4
      %s19 = int_to_ptr.vmem [resolvable:$true] %s18
      %24 = dma.hbm_to_vmem [thread:$0]  %s0, 2048, %s19, [#allocation3], 256, 256, 16
    $region5: #{tpu_custom_call.1} parent=1 // pred_fallthru
      _
    // Predicated region
    $region6: #{tpu_custom_call.1} parent=1 // pred_check
      _
    $region7: #{tpu_custom_call.1} parent=1 // pred_check_branch
      %26 = sbr.rel (0) target = $region9
    $region8: #{tpu_custom_call.1} parent=1 // pred_region
      _
    $region9: #{tpu_custom_call.1} parent=1 // pred_fallthru
      _
    // Predicated region
    $region10: #{tpu_custom_call.1} parent=1 // pred_check
      _
    $region11: #{tpu_custom_call.1} parent=1 // pred_check_branch
      %28 = sbr.rel (0) target = $region13
    $region12: #{tpu_custom_call.1} parent=1 // pred_region
      _
    $region13: #{tpu_custom_call.1} parent=1 // pred_fallthru
      _
    // Predicated region
    $region14: #{tpu_custom_call.1} parent=1 // pred_check
      _
    $region15: #{tpu_custom_call.1} parent=1 // pred_check_branch
      %30 = sbr.rel (0) target = $region17
    $region16: #{tpu_custom_call.1} parent=1 // pred_region
      %s32 = ssub.s32 8192, 8192
      %33 = vsyncadd [#allocation6], %s32
      %s34 = sshll.u32 [#allocation5], 4
      %s35 = int_to_ptr.vmem [resolvable:$true] %s34
      %40 = dma.hbm_to_vmem [thread:$0]  %s3, 8192, %s35, [#allocation6], 256, 256, 16
    $region17: #{tpu_custom_call.1} parent=1 // pred_fallthru
      _
    // Predicated region
    $region18: #{tpu_custom_call.1} parent=1 // pred_check
      _
    $region19: #{tpu_custom_call.1} parent=1 // pred_check_branch
      %42 = sbr.rel (0) target = $region21
    $region20: #{tpu_custom_call.1} parent=1 // pred_region
      %s44 = ssub.s32 8192, 8192
      %45 = vsyncadd [#allocation6], %s44
      %s46 = sshll.u32 [#allocation7], 4
      %s47 = int_to_ptr.vmem [resolvable:$true] %s46
      %52 = dma.hbm_to_vmem [thread:$0]  %s4, 8192, %s47, [#allocation6], 256, 256, 16
    $region21: #{tpu_custom_call.1} parent=1 // pred_fallthru
      _
    // Predicated region
    $region22: #{tpu_custom_call.1} parent=1 // pred_check
      _
    $region23: #{tpu_custom_call.1} parent=1 // pred_check_branch
      %54 = sbr.rel (0) target = $region25
    $region24: #{tpu_custom_call.1} parent=1 // pred_region
      %55 = dma.done [#allocation3], 2048
    $region25: #{tpu_custom_call.1} parent=1 // pred_fallthru
      _
    // Predicated region
    $region26: #{tpu_custom_call.1} parent=1 // pred_check
      _
    $region27: #{tpu_custom_call.1} parent=1 // pred_check_branch
      %57 = sbr.rel (0) target = $region29
    $region28: #{tpu_custom_call.1} parent=1 // pred_region
      %58 = dma.done [#allocation6], 8192
    $region29: #{tpu_custom_call.1} parent=1 // pred_fallthru
      _
    // Predicated region
    $region30: #{tpu_custom_call.1} parent=1 // pred_check
      _
    $region31: #{tpu_custom_call.1} parent=1 // pred_check_branch
      %60 = sbr.rel (0) target = $region33
    $region32: #{tpu_custom_call.1} parent=1 // pred_region
      %61 = dma.done [#allocation6], 8192
    $region33: #{tpu_custom_call.1} parent=1 // pred_fallthru
      _
    %v62 = vld [vmem:[#allocation2] sm:$0xff]
    %v63 = vld [vmem:[#allocation2 + $0x8] sm:$0xff]
    %v64 = vld [vmem:[#allocation2 + $0x10] sm:$0xff]
    %v65 = vld [vmem:[#allocation2 + $0x18] sm:$0xff]
    %v66 = vld [vmem:[#allocation2 + $0x20] sm:$0xff]
    %v67 = vld [vmem:[#allocation2 + $0x28] sm:$0xff]
    %v68 = vld [vmem:[#allocation2 + $0x30] sm:$0xff]
    %v69 = vld [vmem:[#allocation2 + $0x38] sm:$0xff]
    %v70 = vld [vmem:[#allocation2 + $0x40] sm:$0xff]
    %v71 = vld [vmem:[#allocation2 + $0x48] sm:$0xff]
    %v72 = vld [vmem:[#allocation2 + $0x50] sm:$0xff]
    %v73 = vld [vmem:[#allocation2 + $0x58] sm:$0xff]
    %v74 = vld [vmem:[#allocation2 + $0x60] sm:$0xff]
    %v75 = vld [vmem:[#allocation2 + $0x68] sm:$0xff]
    %v76 = vld [vmem:[#allocation2 + $0x70] sm:$0xff]
    %v77 = vld [vmem:[#allocation2 + $0x78] sm:$0xff]
    %v78 = vadd.f32 %v62, %v63
    %79 = vadd.xlane.f32.xlu0 %v78
    %v80 = vpop.xlane.xlu0 %79
    %v81 = vadd.f32 %v64, %v65
    %82 = vadd.xlane.f32.xlu0 %v81
    %v83 = vpop.xlane.xlu0 %82
    %v84 = vadd.f32 %v66, %v67
    %85 = vadd.xlane.f32.xlu0 %v84
    %v86 = vpop.xlane.xlu0 %85
    %v87 = vadd.f32 %v68, %v69
    %88 = vadd.xlane.f32.xlu0 %v87
    %v89 = vpop.xlane.xlu0 %88
    %v90 = vadd.f32 %v70, %v71
    %91 = vadd.xlane.f32.xlu0 %v90
    %v92 = vpop.xlane.xlu0 %91
    %v93 = vadd.f32 %v72, %v73
    %94 = vadd.xlane.f32.xlu0 %v93
    %v95 = vpop.xlane.xlu0 %94
    %v96 = vadd.f32 %v74, %v75
    %97 = vadd.xlane.f32.xlu0 %v96
    %v98 = vpop.xlane.xlu0 %97
    %v99 = vadd.f32 %v76, %v77
    %100 = vadd.xlane.f32.xlu0 %v99
    %v101 = vpop.xlane.xlu0 %100
    %v102 = vld [vmem:[%s1] sm:$0xff]
    %v103 = vld [vmem:[%s1 + $0x8] sm:$0xff]
    %v104 = vld [vmem:[%s1 + $0x10] sm:$0xff]
    %v105 = vld [vmem:[%s1 + $0x18] sm:$0xff]
    %v114 = vlaneseq
    %v115 = vand.u32 %v114, 127
    %v116 = vlaneseq
    %v117 = vshrl.u32 %v116, 7
    %v118 = vsub.s32 %v115, %v117
    %v119 = vrot.slane %v80, %v118
    %v120 = vadd.s32 %v115, 4294967288
    %v121 = vlaneseq
    %v122 = vshrl.u32 %v121, 7
    %v123 = vsub.s32 %v120, %v122
    %v124 = vrot.slane %v83, %v123
    %vm125 = vcmask 130112
    %v126 = vsel %vm125, %v124, %v119
    %v127 = vadd.s32 %v115, 4294967280
    %v128 = vlaneseq
    %v129 = vshrl.u32 %v128, 7
    %v130 = vsub.s32 %v127, %v129
    %v131 = vrot.slane %v86, %v130
    %vm132 = vcmask 195712
    %v133 = vsel %vm132, %v131, %v126
    %v134 = vadd.s32 %v115, 4294967272
    %v135 = vlaneseq
    %v136 = vshrl.u32 %v135, 7
    %v137 = vsub.s32 %v134, %v136
    %v138 = vrot.slane %v89, %v137
    %vm139 = vcmask 261312
    %v140 = vsel %vm139, %v138, %v133
    %v141 = vlaneseq
    %v142 = vshrl.u32 %v141, 7
    %v143 = vsub.s32 %v115, %v142
    %v144 = vrot.slane %v92, %v143
    %v145 = vlaneseq
    %v146 = vshrl.u32 %v145, 7
    %v147 = vsub.s32 %v120, %v146
    %v148 = vrot.slane %v95, %v147
    %v149 = vsel %vm125, %v148, %v144
    %v150 = vlaneseq
    %v151 = vshrl.u32 %v150, 7
    %v152 = vsub.s32 %v127, %v151
    %v153 = vrot.slane %v98, %v152
    %v154 = vsel %vm132, %v153, %v149
    %v155 = vlaneseq
    %v156 = vshrl.u32 %v155, 7
    %v157 = vsub.s32 %v134, %v156
    %v158 = vrot.slane %v101, %v157
    %v159 = vsel %vm139, %v158, %v154
    %vm160 = vcmask 1041409
    %v161 = vsel %vm160, %v159, %v140
    %vm162 = vcmask 261120
    %v163 = vsel %vm162, %v161, 0
    %165 = vmatprep.subr.mxu0 0.0
    %166 = vmatpush1.msra.mxu0 %v102
    %167 = vmatprep.subr.mxu0 0.0
    %168 = vmatpush1.msra.mxu0 %v103
    %169 = vmatprep.subr.mxu0 0.0
    %170 = vmatpush1.msra.mxu0 %v104
    %171 = vmatprep.subr.mxu0 0.0
    %172 = vmatpush1.msra.mxu0 %v105
    %173 = vmatprep.subr.mxu0 0.0
    %174 = vmatpush1.msra.mxu0 0.0
    %175 = vmatprep.subr.mxu0 0.0
    %176 = vmatpush1.msra.mxu0 0.0
    %177 = vmatprep.subr.mxu0 0.0
    %178 = vmatpush1.msra.mxu0 0.0
    %179 = vmatprep.subr.mxu0 0.0
    %180 = vmatpush1.msra.mxu0 0.0
    %181 = vmatprep.subr.mxu0 0.0
    %182 = vmatpush1.msra.mxu0 0.0
    %183 = vmatprep.subr.mxu0 0.0
    %184 = vmatpush1.msra.mxu0 0.0
    %185 = vmatprep.subr.mxu0 0.0
    %186 = vmatpush1.msra.mxu0 0.0
    %187 = vmatprep.subr.mxu0 0.0
    %188 = vmatpush1.msra.mxu0 0.0
    %189 = vmatprep.subr.mxu0 0.0
    %190 = vmatpush1.msra.mxu0 0.0
    %191 = vmatprep.subr.mxu0 0.0
    %192 = vmatpush1.msra.mxu0 0.0
    %193 = vmatprep.subr.mxu0 0.0
    %194 = vmatpush1.msra.mxu0 0.0
    %195 = vmatprep.subr.mxu0 0.0
    %196 = vmatpush1.msra.mxu0 0.0
    %197 = vmatprep.subr.mxu0 0.0
    %198 = vmatpush1.msra.mxu0 0.0
    %199 = vmatprep.subr.mxu0 0.0
    %200 = vmatpush1.msra.mxu0 0.0
    %201 = vmatprep.subr.mxu0 0.0
    %202 = vmatpush1.msra.mxu0 0.0
    %203 = vmatprep.subr.mxu0 0.0
    %204 = vmatpush1.msra.mxu0 0.0
    %205 = vmatprep.subr.mxu0 0.0
    %206 = vmatpush1.msra.mxu0 0.0
    %207 = vmatprep.subr.mxu0 0.0
    %208 = vmatpush1.msra.mxu0 0.0
    %209 = vmatprep.subr.mxu0 0.0
    %210 = vmatpush1.msra.mxu0 0.0
    %211 = vmatprep.subr.mxu0 0.0
    %212 = vmatpush1.msra.mxu0 0.0
    %213 = vmatprep.subr.mxu0 0.0
    %214 = vmatpush1.msra.mxu0 0.0
    %215 = vmatprep.subr.mxu0 0.0
    %216 = vmatpush1.msra.mxu0 0.0
    %217 = vmatprep.subr.mxu0 0.0
    %218 = vmatpush1.msra.mxu0 0.0
    %219 = vmatprep.subr.mxu0 0.0
    %220 = vmatpush1.msra.mxu0 0.0
    %221 = vmatprep.subr.mxu0 0.0
    %222 = vmatpush1.msra.mxu0 0.0
    %223 = vmatprep.subr.mxu0 0.0
    %224 = vmatpush1.msra.mxu0 0.0
    %225 = vmatprep.subr.mxu0 0.0
    %226 = vmatpush1.msra.mxu0 0.0
    %227 = vmatprep.subr.mxu0 0.0
    %228 = vmatpush1.msra.mxu0 0.0
    %229 = vmatprep.mubr.f32.mxu0 0.0
    %230 = vmatmul.mubr.f32.gmra.mrb[0].mxu0 %v163
    %v231 = vpop.f32.mrb[0].mxu0
    %v232 = vadd.f32 0.0, %v231
    %v233 = vpop.f32.mrb[0].mxu0
    %234 = vdwg.mxu0
    %v235 = vmax.f32 %v232, 0.0
    %v236 = vld [vmem:[%s2] sm:$0x3]
    %vm237 = vcmask 15360
    %v239 = vsel %vm237, %v235, 0
    %vm241 = vcmask 1041408
    %v243 = vsel %vm241, %v236, 0
    %245 = vmatprep.subr.mxu0 0.0
    %246 = vmatpush1.msra.mxu0 %v243
    %247 = vmatprep.subr.mxu0 0.0
    %248 = vmatpush1.msra.mxu0 0.0
    %249 = vmatprep.subr.mxu0 0.0
    %250 = vmatpush1.msra.mxu0 0.0
    %251 = vmatprep.subr.mxu0 0.0
    %252 = vmatpush1.msra.mxu0 0.0
    %253 = vmatprep.subr.mxu0 0.0
    %254 = vmatpush1.msra.mxu0 0.0
    %255 = vmatprep.subr.mxu0 0.0
    %256 = vmatpush1.msra.mxu0 0.0
    %257 = vmatprep.subr.mxu0 0.0
    %258 = vmatpush1.msra.mxu0 0.0
    %259 = vmatprep.subr.mxu0 0.0
    %260 = vmatpush1.msra.mxu0 0.0
    %261 = vmatprep.subr.mxu0 0.0
    %262 = vmatpush1.msra.mxu0 0.0
    %263 = vmatprep.subr.mxu0 0.0
    %264 = vmatpush1.msra.mxu0 0.0
    %265 = vmatprep.subr.mxu0 0.0
    %266 = vmatpush1.msra.mxu0 0.0
    %267 = vmatprep.subr.mxu0 0.0
    %268 = vmatpush1.msra.mxu0 0.0
    %269 = vmatprep.subr.mxu0 0.0
    %270 = vmatpush1.msra.mxu0 0.0
    %271 = vmatprep.subr.mxu0 0.0
    %272 = vmatpush1.msra.mxu0 0.0
    %273 = vmatprep.subr.mxu0 0.0
    %274 = vmatpush1.msra.mxu0 0.0
    %275 = vmatprep.subr.mxu0 0.0
    %276 = vmatpush1.msra.mxu0 0.0
    %277 = vmatprep.subr.mxu0 0.0
    %278 = vmatpush1.msra.mxu0 0.0
    %279 = vmatprep.subr.mxu0 0.0
    %280 = vmatpush1.msra.mxu0 0.0
    %281 = vmatprep.subr.mxu0 0.0
    %282 = vmatpush1.msra.mxu0 0.0
    %283 = vmatprep.subr.mxu0 0.0
    %284 = vmatpush1.msra.mxu0 0.0
    %285 = vmatprep.subr.mxu0 0.0
    %286 = vmatpush1.msra.mxu0 0.0
    %287 = vmatprep.subr.mxu0 0.0
    %288 = vmatpush1.msra.mxu0 0.0
    %289 = vmatprep.subr.mxu0 0.0
    %290 = vmatpush1.msra.mxu0 0.0
    %291 = vmatprep.subr.mxu0 0.0
    %292 = vmatpush1.msra.mxu0 0.0
    %293 = vmatprep.subr.mxu0 0.0
    %294 = vmatpush1.msra.mxu0 0.0
    %295 = vmatprep.subr.mxu0 0.0
    %296 = vmatpush1.msra.mxu0 0.0
    %297 = vmatprep.subr.mxu0 0.0
    %298 = vmatpush1.msra.mxu0 0.0
    %299 = vmatprep.subr.mxu0 0.0
    %300 = vmatpush1.msra.mxu0 0.0
    %301 = vmatprep.subr.mxu0 0.0
    %302 = vmatpush1.msra.mxu0 0.0
    %303 = vmatprep.subr.mxu0 0.0
    %304 = vmatpush1.msra.mxu0 0.0
    %305 = vmatprep.subr.mxu0 0.0
    %306 = vmatpush1.msra.mxu0 0.0
    %307 = vmatprep.subr.mxu0 0.0
    %308 = vmatpush1.msra.mxu0 0.0
    %309 = vmatprep.mubr.f32.mxu0 0.0
    %310 = vmatmul.mubr.f32.gmra.mrb[0].mxu0 %v239
    %v311 = vpop.f32.mrb[0].mxu0
    %v312 = vadd.f32 0.0, %v311
    %v313 = vpop.f32.mrb[0].mxu0
    %314 = vdwg.mxu0
    %v315 = vxor.u32 %v312, 2147483648
    %v316 = vmul.f32 %v315, 1.442695
    %v317 = vpow.pop %v316
    %v318 = vadd.f32 %v317, 1.0
    %v319 = vrcp.pop %v318
    %v320 = vmul.f32 1.0, %v319
    %v321 = vlaneseq
    %v322 = vshrl.u32 %v321, 7
    %v323 = vsub.s32 0, %v322
    %v324 = vrot.slane %v320, %v323
    %326 = vbcast.lane.b32.xlu0 %v324, 256
    %v327 = vpop.permute.xlu0 %326
    %s329 = sor.u32 256, 8
    %330 = vbcast.lane.b32.xlu0 %v324, %s329
    %v331 = vpop.permute.xlu0 %330
    %s333 = sor.u32 256, 16
    %334 = vbcast.lane.b32.xlu0 %v324, %s333
    %v335 = vpop.permute.xlu0 %334
    %s337 = sor.u32 256, 24
    %338 = vbcast.lane.b32.xlu0 %v324, %s337
    %v339 = vpop.permute.xlu0 %338
    %v340 = vlaneseq
    %v341 = vshrl.u32 %v340, 7
    %v342 = vsub.s32 1, %v341
    %v343 = vrot.slane %v320, %v342
    %345 = vbcast.lane.b32.xlu0 %v343, 256
    %v346 = vpop.permute.xlu0 %345
    %s348 = sor.u32 256, 8
    %349 = vbcast.lane.b32.xlu0 %v343, %s348
    %v350 = vpop.permute.xlu0 %349
    %s352 = sor.u32 256, 16
    %353 = vbcast.lane.b32.xlu0 %v343, %s352
    %v354 = vpop.permute.xlu0 %353
    %s356 = sor.u32 256, 24
    %357 = vbcast.lane.b32.xlu0 %v343, %s356
    %v358 = vpop.permute.xlu0 %357
    %v359 = vmul.f32 %v62, %v327
    %v360 = vmul.f32 %v63, %v327
    %v361 = vmul.f32 %v64, %v331
    %v362 = vmul.f32 %v65, %v331
    %v363 = vmul.f32 %v66, %v335
    %v364 = vmul.f32 %v67, %v335
    %v365 = vmul.f32 %v68, %v339
    %v366 = vmul.f32 %v69, %v339
    %v367 = vmul.f32 %v70, %v346
    %v368 = vmul.f32 %v71, %v346
    %v369 = vmul.f32 %v72, %v350
    %v370 = vmul.f32 %v73, %v350
    %v371 = vmul.f32 %v74, %v354
    %v372 = vmul.f32 %v75, %v354
    %v373 = vmul.f32 %v76, %v358
    %v374 = vmul.f32 %v77, %v358
    %v375 = vmax.f32 %v359, %v361
    %v376 = vmax.f32 %v375, %v363
    %v377 = vmax.f32 %v376, %v365
    %v378 = vrot.slane %v377, 4
    %v379 = vmax.f32 %v377, %v378
    %v380 = vrot.slane %v379, 2
    %v381 = vmax.f32 %v379, %v380
    %v382 = vrot.slane %v381, 1
    %v383 = vmax.f32 %v381, %v382
    %v384 = vmax.f32 %v360, %v362
    %v385 = vmax.f32 %v384, %v364
    %v386 = vmax.f32 %v385, %v366
    %v387 = vrot.slane %v386, 4
    %v388 = vmax.f32 %v386, %v387
    %v389 = vrot.slane %v388, 2
    %v390 = vmax.f32 %v388, %v389
    %v391 = vrot.slane %v390, 1
    %v392 = vmax.f32 %v390, %v391
    %v393 = vmax.f32 %v367, %v369
    %v394 = vmax.f32 %v393, %v371
    %v395 = vmax.f32 %v394, %v373
    %v396 = vrot.slane %v395, 4
    %v397 = vmax.f32 %v395, %v396
    %v398 = vrot.slane %v397, 2
    %v399 = vmax.f32 %v397, %v398
    %v400 = vrot.slane %v399, 1
    %v401 = vmax.f32 %v399, %v400
    %v402 = vmax.f32 %v368, %v370
    %v403 = vmax.f32 %v402, %v372
    %v404 = vmax.f32 %v403, %v374
    %v405 = vrot.slane %v404, 4
    %v406 = vmax.f32 %v404, %v405
    %v407 = vrot.slane %v406, 2
    %v408 = vmax.f32 %v406, %v407
    %v409 = vrot.slane %v408, 1
    %v410 = vmax.f32 %v408, %v409
    %v411 = vadd.f32 %v359, %v361
    %v412 = vadd.f32 %v411, %v363
    %v413 = vadd.f32 %v412, %v365
    %v414 = vrot.slane %v413, 4
    %v415 = vadd.f32 %v413, %v414
    %v416 = vrot.slane %v415, 2
    %v417 = vadd.f32 %v415, %v416
    %v418 = vrot.slane %v417, 1
    %v419 = vadd.f32 %v417, %v418
    %v420 = vadd.f32 %v360, %v362
    %v421 = vadd.f32 %v420, %v364
    %v422 = vadd.f32 %v421, %v366
    %v423 = vrot.slane %v422, 4
    %v424 = vadd.f32 %v422, %v423
    %v425 = vrot.slane %v424, 2
    %v426 = vadd.f32 %v424, %v425
    %v427 = vrot.slane %v426, 1
    %v428 = vadd.f32 %v426, %v427
    %v429 = vadd.f32 %v367, %v369
    %v430 = vadd.f32 %v429, %v371
    %v431 = vadd.f32 %v430, %v373
    %v432 = vrot.slane %v431, 4
    %v433 = vadd.f32 %v431, %v432
    %v434 = vrot.slane %v433, 2
    %v435 = vadd.f32 %v433, %v434
    %v436 = vrot.slane %v435, 1
    %v437 = vadd.f32 %v435, %v436
    %v438 = vadd.f32 %v368, %v370
    %v439 = vadd.f32 %v438, %v372
    %v440 = vadd.f32 %v439, %v374
    %v441 = vrot.slane %v440, 4
    %v442 = vadd.f32 %v440, %v441
    %v443 = vrot.slane %v442, 2
    %v444 = vadd.f32 %v442, %v443
    %v445 = vrot.slane %v444, 1
    %v446 = vadd.f32 %v444, %v445
    %v447 = vld [vmem:[#allocation5] sm:$0xff]
    %v448 = vld [vmem:[#allocation5 + $0x8] sm:$0xff]
    %v449 = vld [vmem:[#allocation5 + $0x10] sm:$0xff]
    %v450 = vld [vmem:[#allocation5 + $0x18] sm:$0xff]
    %v451 = vld [vmem:[#allocation5 + $0x20] sm:$0xff]
    %v452 = vld [vmem:[#allocation5 + $0x28] sm:$0xff]
    %v453 = vld [vmem:[#allocation5 + $0x30] sm:$0xff]
    %v454 = vld [vmem:[#allocation5 + $0x38] sm:$0xff]
    %v455 = vld [vmem:[#allocation5 + $0x40] sm:$0xff]
    %v456 = vld [vmem:[#allocation5 + $0x48] sm:$0xff]
    %v457 = vld [vmem:[#allocation5 + $0x50] sm:$0xff]
    %v458 = vld [vmem:[#allocation5 + $0x58] sm:$0xff]
    %v459 = vld [vmem:[#allocation5 + $0x60] sm:$0xff]
    %v460 = vld [vmem:[#allocation5 + $0x68] sm:$0xff]
    %v461 = vld [vmem:[#allocation5 + $0x70] sm:$0xff]
    %v462 = vld [vmem:[#allocation5 + $0x78] sm:$0xff]
    %v463 = vld [vmem:[#allocation5 + $0x80] sm:$0xff]
    %v464 = vld [vmem:[#allocation5 + $0x88] sm:$0xff]
    %v465 = vld [vmem:[#allocation5 + $0x90] sm:$0xff]
    %v466 = vld [vmem:[#allocation5 + $0x98] sm:$0xff]
    %v467 = vld [vmem:[#allocation5 + $0xa0] sm:$0xff]
    %v468 = vld [vmem:[#allocation5 + $0xa8] sm:$0xff]
    %v469 = vld [vmem:[#allocation5 + $0xb0] sm:$0xff]
    %v470 = vld [vmem:[#allocation5 + $0xb8] sm:$0xff]
    %v471 = vld [vmem:[#allocation5 + $0xc0] sm:$0xff]
    %v472 = vld [vmem:[#allocation5 + $0xc8] sm:$0xff]
    %v473 = vld [vmem:[#allocation5 + $0xd0] sm:$0xff]
    %v474 = vld [vmem:[#allocation5 + $0xd8] sm:$0xff]
    %v475 = vld [vmem:[#allocation5 + $0xe0] sm:$0xff]
    %v476 = vld [vmem:[#allocation5 + $0xe8] sm:$0xff]
    %v477 = vld [vmem:[#allocation5 + $0xf0] sm:$0xff]
    %v478 = vld [vmem:[#allocation5 + $0xf8] sm:$0xff]
    %v479 = vld [vmem:[#allocation5 + $0x100] sm:$0xff]
    %v480 = vld [vmem:[#allocation5 + $0x108] sm:$0xff]
    %v481 = vld [vmem:[#allocation5 + $0x110] sm:$0xff]
    %v482 = vld [vmem:[#allocation5 + $0x118] sm:$0xff]
    %v483 = vld [vmem:[#allocation5 + $0x120] sm:$0xff]
    %v484 = vld [vmem:[#allocation5 + $0x128] sm:$0xff]
    %v485 = vld [vmem:[#allocation5 + $0x130] sm:$0xff]
    %v486 = vld [vmem:[#allocation5 + $0x138] sm:$0xff]
    %v487 = vld [vmem:[#allocation5 + $0x140] sm:$0xff]
    %v488 = vld [vmem:[#allocation5 + $0x148] sm:$0xff]
    %v489 = vld [vmem:[#allocation5 + $0x150] sm:$0xff]
    %v490 = vld [vmem:[#allocation5 + $0x158] sm:$0xff]
    %v491 = vld [vmem:[#allocation5 + $0x160] sm:$0xff]
    %v492 = vld [vmem:[#allocation5 + $0x168] sm:$0xff]
    %v493 = vld [vmem:[#allocation5 + $0x170] sm:$0xff]
    %v494 = vld [vmem:[#allocation5 + $0x178] sm:$0xff]
    %v495 = vld [vmem:[#allocation5 + $0x180] sm:$0xff]
    %v496 = vld [vmem:[#allocation5 + $0x188] sm:$0xff]
    %v497 = vld [vmem:[#allocation5 + $0x190] sm:$0xff]
    %v498 = vld [vmem:[#allocation5 + $0x198] sm:$0xff]
    %v499 = vld [vmem:[#allocation5 + $0x1a0] sm:$0xff]
    %v500 = vld [vmem:[#allocation5 + $0x1a8] sm:$0xff]
    %v501 = vld [vmem:[#allocation5 + $0x1b0] sm:$0xff]
    %v502 = vld [vmem:[#allocation5 + $0x1b8] sm:$0xff]
    %v503 = vld [vmem:[#allocation5 + $0x1c0] sm:$0xff]
    %v504 = vld [vmem:[#allocation5 + $0x1c8] sm:$0xff]
    %v505 = vld [vmem:[#allocation5 + $0x1d0] sm:$0xff]
    %v506 = vld [vmem:[#allocation5 + $0x1d8] sm:$0xff]
    %v507 = vld [vmem:[#allocation5 + $0x1e0] sm:$0xff]
    %v508 = vld [vmem:[#allocation5 + $0x1e8] sm:$0xff]
    %v509 = vld [vmem:[#allocation5 + $0x1f0] sm:$0xff]
    %v510 = vld [vmem:[#allocation5 + $0x1f8] sm:$0xff]
    %v511 = vld [vmem:[#allocation7] sm:$0xff]
    %v512 = vld [vmem:[#allocation7 + $0x8] sm:$0xff]
    %v513 = vld [vmem:[#allocation7 + $0x10] sm:$0xff]
    %v514 = vld [vmem:[#allocation7 + $0x18] sm:$0xff]
    %v515 = vld [vmem:[#allocation7 + $0x20] sm:$0xff]
    %v516 = vld [vmem:[#allocation7 + $0x28] sm:$0xff]
    %v517 = vld [vmem:[#allocation7 + $0x30] sm:$0xff]
    %v518 = vld [vmem:[#allocation7 + $0x38] sm:$0xff]
    %v519 = vld [vmem:[#allocation7 + $0x40] sm:$0xff]
    %v520 = vld [vmem:[#allocation7 + $0x48] sm:$0xff]
    %v521 = vld [vmem:[#allocation7 + $0x50] sm:$0xff]
    %v522 = vld [vmem:[#allocation7 + $0x58] sm:$0xff]
    %v523 = vld [vmem:[#allocation7 + $0x60] sm:$0xff]
    %v524 = vld [vmem:[#allocation7 + $0x68] sm:$0xff]
    %v525 = vld [vmem:[#allocation7 + $0x70] sm:$0xff]
    %v526 = vld [vmem:[#allocation7 + $0x78] sm:$0xff]
    %v527 = vld [vmem:[#allocation7 + $0x80] sm:$0xff]
    %v528 = vld [vmem:[#allocation7 + $0x88] sm:$0xff]
    %v529 = vld [vmem:[#allocation7 + $0x90] sm:$0xff]
    %v530 = vld [vmem:[#allocation7 + $0x98] sm:$0xff]
    %v531 = vld [vmem:[#allocation7 + $0xa0] sm:$0xff]
    %v532 = vld [vmem:[#allocation7 + $0xa8] sm:$0xff]
    %v533 = vld [vmem:[#allocation7 + $0xb0] sm:$0xff]
    %v534 = vld [vmem:[#allocation7 + $0xb8] sm:$0xff]
    %v535 = vld [vmem:[#allocation7 + $0xc0] sm:$0xff]
    %v536 = vld [vmem:[#allocation7 + $0xc8] sm:$0xff]
    %v537 = vld [vmem:[#allocation7 + $0xd0] sm:$0xff]
    %v538 = vld [vmem:[#allocation7 + $0xd8] sm:$0xff]
    %v539 = vld [vmem:[#allocation7 + $0xe0] sm:$0xff]
    %v540 = vld [vmem:[#allocation7 + $0xe8] sm:$0xff]
    %v541 = vld [vmem:[#allocation7 + $0xf0] sm:$0xff]
    %v542 = vld [vmem:[#allocation7 + $0xf8] sm:$0xff]
    %v543 = vld [vmem:[#allocation7 + $0x100] sm:$0xff]
    %v544 = vld [vmem:[#allocation7 + $0x108] sm:$0xff]
    %v545 = vld [vmem:[#allocation7 + $0x110] sm:$0xff]
    %v546 = vld [vmem:[#allocation7 + $0x118] sm:$0xff]
    %v547 = vld [vmem:[#allocation7 + $0x120] sm:$0xff]
    %v548 = vld [vmem:[#allocation7 + $0x128] sm:$0xff]
    %v549 = vld [vmem:[#allocation7 + $0x130] sm:$0xff]
    %v550 = vld [vmem:[#allocation7 + $0x138] sm:$0xff]
    %v551 = vld [vmem:[#allocation7 + $0x140] sm:$0xff]
    %v552 = vld [vmem:[#allocation7 + $0x148] sm:$0xff]
    %v553 = vld [vmem:[#allocation7 + $0x150] sm:$0xff]
    %v554 = vld [vmem:[#allocation7 + $0x158] sm:$0xff]
    %v555 = vld [vmem:[#allocation7 + $0x160] sm:$0xff]
    %v556 = vld [vmem:[#allocation7 + $0x168] sm:$0xff]
    %v557 = vld [vmem:[#allocation7 + $0x170] sm:$0xff]
    %v558 = vld [vmem:[#allocation7 + $0x178] sm:$0xff]
    %v559 = vld [vmem:[#allocation7 + $0x180] sm:$0xff]
    %v560 = vld [vmem:[#allocation7 + $0x188] sm:$0xff]
    %v561 = vld [vmem:[#allocation7 + $0x190] sm:$0xff]
    %v562 = vld [vmem:[#allocation7 + $0x198] sm:$0xff]
    %v563 = vld [vmem:[#allocation7 + $0x1a0] sm:$0xff]
    %v564 = vld [vmem:[#allocation7 + $0x1a8] sm:$0xff]
    %v565 = vld [vmem:[#allocation7 + $0x1b0] sm:$0xff]
    %v566 = vld [vmem:[#allocation7 + $0x1b8] sm:$0xff]
    %v567 = vld [vmem:[#allocation7 + $0x1c0] sm:$0xff]
    %v568 = vld [vmem:[#allocation7 + $0x1c8] sm:$0xff]
    %v569 = vld [vmem:[#allocation7 + $0x1d0] sm:$0xff]
    %v570 = vld [vmem:[#allocation7 + $0x1d8] sm:$0xff]
    %v571 = vld [vmem:[#allocation7 + $0x1e0] sm:$0xff]
    %v572 = vld [vmem:[#allocation7 + $0x1e8] sm:$0xff]
    %v573 = vld [vmem:[#allocation7 + $0x1f0] sm:$0xff]
    %v574 = vld [vmem:[#allocation7 + $0x1f8] sm:$0xff]
    %v579 = vsel %vm160, %v437, %v419
    %v580 = vsel %vm160, %v446, %v428
    %583 = vmatprep.subr.mxu0 %v512
    %584 = vmatpush1.msra.mxu0 %v511
    %585 = vmatprep.subr.mxu0 %v514
    %586 = vmatpush1.msra.mxu0 %v513
    %587 = vmatprep.subr.mxu0 %v516
    %588 = vmatpush1.msra.mxu0 %v515
    %589 = vmatprep.subr.mxu0 %v518
    %590 = vmatpush1.msra.mxu0 %v517
    %591 = vmatprep.subr.mxu0 %v520
    %592 = vmatpush1.msra.mxu0 %v519
    %593 = vmatprep.subr.mxu0 %v522
    %594 = vmatpush1.msra.mxu0 %v521
    %595 = vmatprep.subr.mxu0 %v524
    %596 = vmatpush1.msra.mxu0 %v523
    %597 = vmatprep.subr.mxu0 %v526
    %598 = vmatpush1.msra.mxu0 %v525
    %599 = vmatprep.subr.mxu0 %v528
    %600 = vmatpush1.msra.mxu0 %v527
    %601 = vmatprep.subr.mxu0 %v530
    %602 = vmatpush1.msra.mxu0 %v529
    %603 = vmatprep.subr.mxu0 %v532
    %604 = vmatpush1.msra.mxu0 %v531
    %605 = vmatprep.subr.mxu0 %v534
    %606 = vmatpush1.msra.mxu0 %v533
    %607 = vmatprep.subr.mxu0 %v536
    %608 = vmatpush1.msra.mxu0 %v535
    %609 = vmatprep.subr.mxu0 %v538
    %610 = vmatpush1.msra.mxu0 %v537
    %611 = vmatprep.subr.mxu0 %v540
    %612 = vmatpush1.msra.mxu0 %v539
    %613 = vmatprep.subr.mxu0 %v542
    %614 = vmatpush1.msra.mxu0 %v541
    %615 = vmatprep.subr.mxu0 %v544
    %616 = vmatpush1.msra.mxu0 %v543
    %617 = vmatprep.subr.mxu0 %v546
    %618 = vmatpush1.msra.mxu0 %v545
    %619 = vmatprep.subr.mxu0 %v548
    %620 = vmatpush1.msra.mxu0 %v547
    %621 = vmatprep.subr.mxu0 %v550
    %622 = vmatpush1.msra.mxu0 %v549
    %623 = vmatprep.subr.mxu0 %v552
    %624 = vmatpush1.msra.mxu0 %v551
    %625 = vmatprep.subr.mxu0 %v554
    %626 = vmatpush1.msra.mxu0 %v553
    %627 = vmatprep.subr.mxu0 %v556
    %628 = vmatpush1.msra.mxu0 %v555
    %629 = vmatprep.subr.mxu0 %v558
    %630 = vmatpush1.msra.mxu0 %v557
    %631 = vmatprep.subr.mxu0 %v560
    %632 = vmatpush1.msra.mxu0 %v559
    %633 = vmatprep.subr.mxu0 %v562
    %634 = vmatpush1.msra.mxu0 %v561
    %635 = vmatprep.subr.mxu0 %v564
    %636 = vmatpush1.msra.mxu0 %v563
    %637 = vmatprep.subr.mxu0 %v566
    %638 = vmatpush1.msra.mxu0 %v565
    %639 = vmatprep.subr.mxu0 %v568
    %640 = vmatpush1.msra.mxu0 %v567
    %641 = vmatprep.subr.mxu0 %v570
    %642 = vmatpush1.msra.mxu0 %v569
    %643 = vmatprep.subr.mxu0 %v572
    %644 = vmatpush1.msra.mxu0 %v571
    %645 = vmatprep.subr.mxu0 %v574
    %646 = vmatpush1.msra.mxu0 %v573
    %647 = vmatprep.mubr.f32.mxu0 %v580
    %648 = vmatmul.mubr.f32.gmra.mrb[0].mxu0 %v579
    %v649 = vpop.f32.mrb[0].mxu0
    %v650 = vadd.f32 0.0, %v649
    %v651 = vpop.f32.mrb[0].mxu0
    %v652 = vadd.f32 0.0, %v651
    %653 = vdwg.mxu0
    %v658 = vsel %vm160, %v401, %v383
    %v659 = vsel %vm160, %v410, %v392
    %662 = vmatprep.subr.mxu0 %v448
    %663 = vmatpush1.msra.mxu0 %v447
    %664 = vmatprep.subr.mxu0 %v450
    %665 = vmatpush1.msra.mxu0 %v449
    %666 = vmatprep.subr.mxu0 %v452
    %667 = vmatpush1.msra.mxu0 %v451
    %668 = vmatprep.subr.mxu0 %v454
    %669 = vmatpush1.msra.mxu0 %v453
    %670 = vmatprep.subr.mxu0 %v456
    %671 = vmatpush1.msra.mxu0 %v455
    %672 = vmatprep.subr.mxu0 %v458
    %673 = vmatpush1.msra.mxu0 %v457
    %674 = vmatprep.subr.mxu0 %v460
    %675 = vmatpush1.msra.mxu0 %v459
    %676 = vmatprep.subr.mxu0 %v462
    %677 = vmatpush1.msra.mxu0 %v461
    %678 = vmatprep.subr.mxu0 %v464
    %679 = vmatpush1.msra.mxu0 %v463
    %680 = vmatprep.subr.mxu0 %v466
    %681 = vmatpush1.msra.mxu0 %v465
    %682 = vmatprep.subr.mxu0 %v468
    %683 = vmatpush1.msra.mxu0 %v467
    %684 = vmatprep.subr.mxu0 %v470
    %685 = vmatpush1.msra.mxu0 %v469
    %686 = vmatprep.subr.mxu0 %v472
    %687 = vmatpush1.msra.mxu0 %v471
    %688 = vmatprep.subr.mxu0 %v474
    %689 = vmatpush1.msra.mxu0 %v473
    %690 = vmatprep.subr.mxu0 %v476
    %691 = vmatpush1.msra.mxu0 %v475
    %692 = vmatprep.subr.mxu0 %v478
    %693 = vmatpush1.msra.mxu0 %v477
    %694 = vmatprep.subr.mxu0 %v480
    %695 = vmatpush1.msra.mxu0 %v479
    %696 = vmatprep.subr.mxu0 %v482
    %697 = vmatpush1.msra.mxu0 %v481
    %698 = vmatprep.subr.mxu0 %v484
    %699 = vmatpush1.msra.mxu0 %v483
    %700 = vmatprep.subr.mxu0 %v486
    %701 = vmatpush1.msra.mxu0 %v485
    %702 = vmatprep.subr.mxu0 %v488
    %703 = vmatpush1.msra.mxu0 %v487
    %704 = vmatprep.subr.mxu0 %v490
    %705 = vmatpush1.msra.mxu0 %v489
    %706 = vmatprep.subr.mxu0 %v492
    %707 = vmatpush1.msra.mxu0 %v491
    %708 = vmatprep.subr.mxu0 %v494
    %709 = vmatpush1.msra.mxu0 %v493
    %710 = vmatprep.subr.mxu0 %v496
    %711 = vmatpush1.msra.mxu0 %v495
    %712 = vmatprep.subr.mxu0 %v498
    %713 = vmatpush1.msra.mxu0 %v497
    %714 = vmatprep.subr.mxu0 %v500
    %715 = vmatpush1.msra.mxu0 %v499
    %716 = vmatprep.subr.mxu0 %v502
    %717 = vmatpush1.msra.mxu0 %v501
    %718 = vmatprep.subr.mxu0 %v504
    %719 = vmatpush1.msra.mxu0 %v503
    %720 = vmatprep.subr.mxu0 %v506
    %721 = vmatpush1.msra.mxu0 %v505
    %722 = vmatprep.subr.mxu0 %v508
    %723 = vmatpush1.msra.mxu0 %v507
    %724 = vmatprep.subr.mxu0 %v510
    %725 = vmatpush1.msra.mxu0 %v509
    %726 = vmatprep.mubr.f32.mxu0 %v659
    %727 = vmatmul.mubr.f32.gmra.mrb[0].mxu0 %v658
    %v728 = vpop.f32.mrb[0].mxu0
    %v729 = vadd.f32 %v650, %v728
    %v730 = vpop.f32.mrb[0].mxu0
    %v731 = vadd.f32 %v652, %v730
    %732 = vdwg.mxu0
    %v733 = vxor.u32 %v729, 2147483648
    %v734 = vxor.u32 %v731, 2147483648
    %v735 = vmul.f32 %v733, 1.442695
    %v736 = vpow.pop %v735
    %v737 = vmul.f32 %v734, 1.442695
    %v738 = vpow.pop %v737
    %v739 = vadd.f32 %v736, 1.0
    %v740 = vadd.f32 %v738, 1.0
    %v741 = vrcp.pop %v739
    %v742 = vmul.f32 1.0, %v741
    %v743 = vrcp.pop %v740
    %v744 = vmul.f32 1.0, %v743
    %v747 = vcombine.low %v742, %v744
    %v749 = vunpack.c.l.s4 1966171168
    %v750 = vunpack.c.0.s8 %v749
    %v751 = vlaneseq
    %v752 = vshrl.u32 %v751, 7
    %v753 = vsub.s32 %v750, %v752
    %v754 = vrot.slane %v747, %v753
    %v755 = vcombine.high %v754, %v754
    %v757 = vunpack.c.l.s4 1966171168
    %v758 = vunpack.c.0.s8 %v757
    %v759 = vlaneseq
    %v760 = vshrl.u32 %v759, 7
    %v761 = vsub.s32 %v758, %v760
    %v762 = vrot.slane %v754, %v761
    %v764 = vunpack.c.l.s4 1966171168
    %v765 = vunpack.c.0.s8 %v764
    %v766 = vlaneseq
    %v767 = vshrl.u32 %v766, 7
    %v768 = vsub.s32 %v765, %v767
    %v769 = vrot.slane %v755, %v768
    %v770 = vlaneseq
    %v771 = vshrl.u32 %v770, 7
    %v772 = vsub.s32 0, %v771
    %v773 = vrot.slane %v762, %v772
    %v774 = vlaneseq
    %v775 = vshrl.u32 %v774, 7
    %v776 = vsub.s32 1, %v775
    %v777 = vrot.slane %v762, %v776
    %v778 = vlaneseq
    %v779 = vshrl.u32 %v778, 7
    %v780 = vsub.s32 0, %v779
    %v781 = vrot.slane %v769, %v780
    %v782 = vlaneseq
    %v783 = vshrl.u32 %v782, 7
    %v784 = vsub.s32 1, %v783
    %v785 = vrot.slane %v769, %v784
    %v790 = vmul.f32 %v359, %v773
    %v791 = vmul.f32 %v360, %v777
    %v792 = vmul.f32 %v361, %v773
    %v793 = vmul.f32 %v362, %v777
    %v794 = vmul.f32 %v363, %v773
    %v795 = vmul.f32 %v364, %v777
    %v796 = vmul.f32 %v365, %v773
    %v797 = vmul.f32 %v366, %v777
    %v798 = vmul.f32 %v367, %v781
    %v799 = vmul.f32 %v368, %v785
    %v800 = vmul.f32 %v369, %v781
    %v801 = vmul.f32 %v370, %v785
    %v802 = vmul.f32 %v371, %v781
    %v803 = vmul.f32 %v372, %v785
    %v804 = vmul.f32 %v373, %v781
    %v805 = vmul.f32 %v374, %v785
    %806 = vst [vmem:[#allocation8] sm:$0xff] %v790
    %807 = vst [vmem:[#allocation8 + $0x8] sm:$0xff] %v791
    %808 = vst [vmem:[#allocation8 + $0x10] sm:$0xff] %v792
    %809 = vst [vmem:[#allocation8 + $0x18] sm:$0xff] %v793
    %810 = vst [vmem:[#allocation8 + $0x20] sm:$0xff] %v794
    %811 = vst [vmem:[#allocation8 + $0x28] sm:$0xff] %v795
    %812 = vst [vmem:[#allocation8 + $0x30] sm:$0xff] %v796
    %813 = vst [vmem:[#allocation8 + $0x38] sm:$0xff] %v797
    %814 = vst [vmem:[#allocation8 + $0x40] sm:$0xff] %v798
    %815 = vst [vmem:[#allocation8 + $0x48] sm:$0xff] %v799
    %816 = vst [vmem:[#allocation8 + $0x50] sm:$0xff] %v800
    %817 = vst [vmem:[#allocation8 + $0x58] sm:$0xff] %v801
    %818 = vst [vmem:[#allocation8 + $0x60] sm:$0xff] %v802
    %819 = vst [vmem:[#allocation8 + $0x68] sm:$0xff] %v803
    %820 = vst [vmem:[#allocation8 + $0x70] sm:$0xff] %v804
    %821 = vst [vmem:[#allocation8 + $0x78] sm:$0xff] %v805
    // Predicated region
    $region34: #{tpu_custom_call.1} parent=1 // pred_check
      _
    $region35: #{tpu_custom_call.1} parent=1 // pred_check_branch
      %823 = sbr.rel (0) target = $region37
    $region36: #{tpu_custom_call.1} parent=1 // pred_region
      %s825 = ssub.s32 2048, 2048
      %826 = vsyncadd [#allocation4], %s825
      %s827 = sshll.u32 [#allocation8], 4
      %s828 = int_to_ptr.vmem [resolvable:$true] %s827
      %833 = dma.vmem_to_hbm [thread:$0]  %s828, 2048, %s5, [#allocation4], 256, 256, 16
    $region37: #{tpu_custom_call.1} parent=1 // pred_fallthru
      _
    // Predicated region
    $region38: #{tpu_custom_call.1} parent=1 // pred_check
      _
    $region39: #{tpu_custom_call.1} parent=1 // pred_check_branch
      %835 = sbr.rel (0) target = $region41
    $region40: #{tpu_custom_call.1} parent=1 // pred_region
      %836 = dma.done [#allocation4], 2048
    $region41: #{tpu_custom_call.1} parent=1 // pred_fallthru
      _
    %837 = vsyncpa [#allocation3], 1
    %838 = vsyncpa [#allocation6], 1
    %839 = vsyncpa [#allocation4], 1

</llo_original>
